<compile_context>
chip_gen: v6e
topology: v6e:2x2x1
jax: 0.10.0
libtpu: 0.0.40
codegen_flags: <defaults>
</compile_context>

<pallas_src>
import functools

import jax
import jax.numpy as jnp
from jax.experimental import pallas as pl
from jax.experimental.pallas import tpu as pltpu

LANES = 128
MAX_TILE_ROWS = 8192                   # 8192 * 128 * 4B = 4 MiB per f32 input block
VMEM_LIMIT_BYTES = 32 * 1024 * 1024    # 2 inputs x 2 buffers x 4 MiB = 16 MiB + slack


def _round_up(a, b):
    return ((a + b - 1) // b) * b


def _min_sublane(dtype):
    # Native sublane tiling scales with packing: f32 -> 8, bf16 -> 16, int8/bool -> 32.
    return max(8, 32 // jnp.dtype(dtype).itemsize)


def _num_tensorcores():
    # Only v7x has 2 TensorCores per chip; elsewhere the split is pure overhead.
    try:
        kind = jax.devices()[0].device_kind.lower()
    except Exception:
        return 1
    return 2 if "v7" in kind else 1


def _dice_partials_kernel(x_ref, y_ref, o_ref, *, rows, tile_rows, chunk_rows,
                          steps_per_core, needs_mask):
    """Accumulate vreg-shaped partial sums of x*y and x+y into the output block.

    o_ref block: (1, 2, 8, 128) f32, VMEM-resident across the inner
    ("arbitrary") grid axis -> acts as the accumulator.
    """
    i = pl.program_id(1)

    @pl.when(i == 0)
    def _():
        o_ref[...] = jnp.zeros_like(o_ref)

    n_chunks = tile_rows // chunk_rows
    group = chunk_rows // 8

    def accumulate(valid_rows):
        # Streaming accumulation over small (chunk_rows, 128) slices keeps vreg
        # pressure at a handful of registers; no full-tile temporaries in VMEM.
        def body(j, carry):
            p_acc, s_acc = carry
            r = pl.multiple_of(j * chunk_rows, chunk_rows)
            xs = x_ref[pl.ds(r, chunk_rows), :].astype(jnp.float32)
            ys = y_ref[pl.ds(r, chunk_rows), :].astype(jnp.float32)
            if valid_rows is not None:
                # Rows past the real row count (tile tail, or a fully-clamped
                # duplicated block) are zeroed BEFORE any product/sum.
                row_id = jax.lax.broadcasted_iota(
                    jnp.int32, (chunk_rows, LANES), 0) + r
                keep = row_id < valid_rows
                zero = jnp.float32(0.0)
                xs = jnp.where(keep, xs, zero)
                ys = jnp.where(keep, ys, zero)
            # Fold (chunk_rows,128) -> (8,128): pure VALU adds along sublane
            # groups (the split by 8 matches native tiling, reshape is free).
            p = (xs * ys).reshape(group, 8, LANES).sum(axis=0)
            s = (xs + ys).reshape(group, 8, LANES).sum(axis=0)
            return p_acc + p, s_acc + s

        init = (jnp.zeros((8, LANES), jnp.float32),
                jnp.zeros((8, LANES), jnp.float32))
        p_tot, s_tot = jax.lax.fori_loop(0, n_chunks, body, init)
        o_ref[0, 0, :, :] += p_tot
        o_ref[0, 1, :, :] += s_tot

    if not needs_mask:
        accumulate(None)
    else:
        c = pl.program_id(0)
        block = c * steps_per_core + i
        valid = rows - block * tile_rows          # may be <= 0 for a clamped block

        @pl.when(valid >= tile_rows)              # steady state: mask-free path
        def _():
            accumulate(None)

        @pl.when(valid < tile_rows)               # tail / duplicated block only
        def _():
            accumulate(valid)


def dice_loss(inputs, targets, smooth=1e-6):
    """Pallas TPU DiceLoss; accepts any matching-size shapes (e.g. NCHW)."""
    x = jnp.ravel(inputs)            # free reshape for contiguous inputs
    y = jnp.ravel(targets)
    assert x.size == y.size, "inputs and targets must have the same number of elements"
    n = x.size

    # A non-128-aligned tail (<128 elements) is summed in the wrapper instead of
    # padding/copying the full arrays; the kernel reads each operand exactly once.
    n_main = (n // LANES) * LANES
    tail_inter = jnp.float32(0.0)
    tail_sum = jnp.float32(0.0)
    if n_main < n:
        xt = x[n_main:].astype(jnp.float32)
        yt = y[n_main:].astype(jnp.float32)
        tail_inter = jnp.sum(xt * yt)
        tail_sum = jnp.sum(xt) + jnp.sum(yt)

    smooth = jnp.float32(smooth)
    if n_main == 0:
        dice = (2.0 * tail_inter + smooth) / (tail_sum + smooth)
        return jnp.float32(1.0) - dice

    rows = n_main // LANES
    x2 = x[:n_main].reshape(rows, LANES)   # free row-major split of the flat axis
    y2 = y[:n_main].reshape(rows, LANES)

    row_align = max(_min_sublane(x2.dtype), _min_sublane(y2.dtype))
    tile_rows = min(MAX_TILE_ROWS, _round_up(rows, row_align))
    # chunk_rows: a divisor of tile_rows that is a multiple of row_align
    # (row_align itself always qualifies, so this always succeeds).
    chunk_rows = tile_rows
    for cand in (64, 32, 16, 8):
        if tile_rows % cand == 0 and cand % row_align == 0:
            chunk_rows = cand
            break

    num_splits = _num_tensorcores()
    total_steps = -(-rows // tile_rows)                  # ceil
    steps_per_core = -(-total_steps // num_splits)       # ceil
    # Mask needed whenever the (split, tiled) iteration space over-covers rows.
    needs_mask = (num_splits * steps_per_core * tile_rows != rows)

    def in_map(c, i):
        # Clamp so no block is read out of bounds; any duplicated block is
        # fully masked inside the kernel and contributes zero.
        b = jnp.minimum(c * steps_per_core + i, total_steps - 1)
        return (b, 0)

    kernel = functools.partial(
        _dice_partials_kernel, rows=rows, tile_rows=tile_rows,
        chunk_rows=chunk_rows, steps_per_core=steps_per_core,
        needs_mask=needs_mask)

    if num_splits > 1:
        # v7x: actually shard the leading axis across the 2 TensorCores.
        semantics = (getattr(pltpu, "CORE_PARALLEL", "parallel"), "arbitrary")
    else:
        semantics = ("arbitrary", "arbitrary")

    out_bytes = num_splits * 2 * 8 * LANES * 4
    bytes_accessed = (x2.size * x2.dtype.itemsize
                      + y2.size * y2.dtype.itemsize + out_bytes)

    partials = pl.pallas_call(
        kernel,
        out_shape=jax.ShapeDtypeStruct((num_splits, 2, 8, LANES), jnp.float32),
        grid_spec=pltpu.PrefetchScalarGridSpec(
            num_scalar_prefetch=0,
            grid=(num_splits, steps_per_core),
            in_specs=[
                pl.BlockSpec((tile_rows, LANES), in_map),
                pl.BlockSpec((tile_rows, LANES), in_map),
            ],
            out_specs=pl.BlockSpec((1, 2, 8, LANES), lambda c, i: (c, 0, 0, 0)),
        ),
        compiler_params=pltpu.CompilerParams(
            dimension_semantics=semantics,
            vmem_limit_bytes=VMEM_LIMIT_BYTES,
        ),
        cost_estimate=pl.CostEstimate(
            flops=3 * n, transcendentals=0, bytes_accessed=bytes_accessed),
    )(x2, y2)

    # Tiny final cross-lane reduction + divide in the wrapper (runs once).
    intersection = jnp.sum(partials[:, 0]) + tail_inter
    sum_xy = jnp.sum(partials[:, 1]) + tail_sum       # == inputs.sum() + targets.sum()
    dice = (2.0 * intersection + smooth) / (sum_xy + smooth)
    return jnp.float32(1.0) - dice


def dice_loss_ref(inputs, targets, smooth=1e-6):
    x = jnp.ravel(inputs).astype(jnp.float32)
    y = jnp.ravel(targets).astype(jnp.float32)
    inter = jnp.sum(x * y)
    dice = (2.0 * inter + smooth) / (jnp.sum(x) + jnp.sum(y) + smooth)
    return 1.0 - dice


if __name__ == "__main__":
    key = jax.random.PRNGKey(0)
    k1, k2 = jax.random.split(key)

    # Small NCHW shapes: batch=2, channels=4, spatial=16x16.
    shape = (2, 4, 16, 16)
    inputs = jax.nn.sigmoid(jax.random.normal(k1, shape, dtype=jnp.float32))
    targets = (jax.random.uniform(k2, shape) > 0.5).astype(jnp.float32)

    loss = jax.block_until_ready(dice_loss(inputs, targets))
    ref = jax.block_until_ready(dice_loss_ref(inputs, targets))
    assert jnp.allclose(loss, ref, rtol=1e-5, atol=1e-6), (loss, ref)

    print("KERNEL_OK")
</pallas_src>

<mosaic_0001>
module attributes {stable_mosaic.version = 11 : i64} {
  func.func @_dice_partials_kernel(%arg0: i32, %arg1: i32, %arg2: memref<16x128xf32, #tpu.memory_space<vmem>>, %arg3: memref<16x128xf32, #tpu.memory_space<vmem>>, %arg4: memref<1x2x8x128xf32, #tpu.memory_space<vmem>>) attributes {dimension_semantics = [#tpu.dimension_semantics<arbitrary>, #tpu.dimension_semantics<arbitrary>], iteration_bounds = array<i64: 1, 1>, scalar_prefetch = 0 : i64, scratch_operands = 0 : i64, tpu.core_type = #tpu.core_type<tc>, window_params = [{transform_indices = @transform_0, window_bounds = array<i64: 16, 128>}, {transform_indices = @transform_1, window_bounds = array<i64: 16, 128>}, {transform_indices = @transform_2, window_bounds = array<i64: 1, 2, 8, 128>}]} {
    %c0_i32 = arith.constant 0 : i32
    %0 = arith.cmpi eq, %arg1, %c0_i32 : i32
    %1 = arith.extui %0 : i1 to i32
    %c0_i32_0 = arith.constant 0 : i32
    %2 = arith.cmpi ne, %1, %c0_i32_0 : i32
    scf.if %2 {
      %cst_21 = arith.constant 0.000000e+00 : f32
      %31 = vector.broadcast %cst_21 : f32 to vector<1x2x8x128xf32>
      %c0_22 = arith.constant 0 : index
      %c0_23 = arith.constant 0 : index
      %c0_24 = arith.constant 0 : index
      %c0_25 = arith.constant 0 : index
      %32 = vector.load %arg4[%c0_22, %c0_23, %c0_24, %c0_25] : memref<1x2x8x128xf32, #tpu.memory_space<vmem>>, vector<1x2x8x128xf32>
      tpu.vector_store %arg4[%c0_22, %c0_23, %c0_24, %c0_25], %31 {strides = array<i32>} : memref<1x2x8x128xf32, #tpu.memory_space<vmem>>, vector<1x2x8x128xf32>,
    } else {
    }
    %cst = arith.constant 0.000000e+00 : f32
    %3 = vector.broadcast %cst : f32 to vector<8x128xf32>
    %cst_1 = arith.constant 0.000000e+00 : f32
    %4 = vector.broadcast %cst_1 : f32 to vector<8x128xf32>
    %c0_i32_2 = arith.constant 0 : i32
    %c16_i32 = arith.constant 16 : i32
    %5 = arith.muli %c0_i32_2, %c16_i32 : i32
    %6 = tpu.assume_multiple %5, 16 : i32
    %7 = arith.index_cast %6 : i32 to index
    %c0 = arith.constant 0 : index
    %8 = vector.load %arg2[%7, %c0] : memref<16x128xf32, #tpu.memory_space<vmem>>, vector<16x128xf32>
    %9 = arith.index_cast %6 : i32 to index
    %c0_3 = arith.constant 0 : index
    %10 = vector.load %arg3[%9, %c0_3] : memref<16x128xf32, #tpu.memory_space<vmem>>, vector<16x128xf32>
    %11 = arith.mulf %8, %10 : vector<16x128xf32>
    %12 = vector.shape_cast %11 : vector<16x128xf32> to vector<2x8x128xf32>
    %cst_4 = arith.constant dense<0.000000e+00> : vector<8x128xf32>
    %13 = vector.multi_reduction <add>, %12, %cst_4 [0] : vector<2x8x128xf32> to vector<8x128xf32>
    %14 = arith.addf %8, %10 : vector<16x128xf32>
    %15 = vector.shape_cast %14 : vector<16x128xf32> to vector<2x8x128xf32>
    %cst_5 = arith.constant dense<0.000000e+00> : vector<8x128xf32>
    %16 = vector.multi_reduction <add>, %15, %cst_5 [0] : vector<2x8x128xf32> to vector<8x128xf32>
    %17 = arith.addf %3, %13 : vector<8x128xf32>
    %18 = arith.addf %4, %16 : vector<8x128xf32>
    %c1_i32 = arith.constant 1 : i32
    %c0_6 = arith.constant 0 : index
    %c0_7 = arith.constant 0 : index
    %c0_8 = arith.constant 0 : index
    %c0_9 = arith.constant 0 : index
    %19 = vector.load %arg4[%c0_6, %c0_7, %c0_8, %c0_9] : memref<1x2x8x128xf32, #tpu.memory_space<vmem>>, vector<1x1x8x128xf32>
    %20 = vector.shape_cast %19 : vector<1x1x8x128xf32> to vector<8x128xf32>
    %21 = arith.addf %20, %17 : vector<8x128xf32>
    %c0_10 = arith.constant 0 : index
    %c0_11 = arith.constant 0 : index
    %c0_12 = arith.constant 0 : index
    %c0_13 = arith.constant 0 : index
    %22 = vector.load %arg4[%c0_10, %c0_11, %c0_12, %c0_13] : memref<1x2x8x128xf32, #tpu.memory_space<vmem>>, vector<1x1x8x128xf32>
    %23 = vector.shape_cast %22 : vector<1x1x8x128xf32> to vector<8x128xf32>
    %24 = vector.shape_cast %21 : vector<8x128xf32> to vector<1x1x8x128xf32>
    tpu.vector_store %arg4[%c0_10, %c0_11, %c0_12, %c0_13], %24 {strides = array<i32>} : memref<1x2x8x128xf32, #tpu.memory_space<vmem>>, vector<1x1x8x128xf32>,
    %c0_14 = arith.constant 0 : index
    %c1 = arith.constant 1 : index
    %c0_15 = arith.constant 0 : index
    %c0_16 = arith.constant 0 : index
    %25 = vector.load %arg4[%c0_14, %c1, %c0_15, %c0_16] : memref<1x2x8x128xf32, #tpu.memory_space<vmem>>, vector<1x1x8x128xf32>
    %26 = vector.shape_cast %25 : vector<1x1x8x128xf32> to vector<8x128xf32>
    %27 = arith.addf %26, %18 : vector<8x128xf32>
    %c0_17 = arith.constant 0 : index
    %c1_18 = arith.constant 1 : index
    %c0_19 = arith.constant 0 : index
    %c0_20 = arith.constant 0 : index
    %28 = vector.load %arg4[%c0_17, %c1_18, %c0_19, %c0_20] : memref<1x2x8x128xf32, #tpu.memory_space<vmem>>, vector<1x1x8x128xf32>
    %29 = vector.shape_cast %28 : vector<1x1x8x128xf32> to vector<8x128xf32>
    %30 = vector.shape_cast %27 : vector<8x128xf32> to vector<1x1x8x128xf32>
    tpu.vector_store %arg4[%c0_17, %c1_18, %c0_19, %c0_20], %30 {strides = array<i32>} : memref<1x2x8x128xf32, #tpu.memory_space<vmem>>, vector<1x1x8x128xf32>,
    return
  }
  func.func @transform_0(%arg0: i32, %arg1: i32) -> (i32, i32) {
    %c1_i32 = arith.constant 1 : i32
    %0 = arith.muli %arg0, %c1_i32 : i32
    %1 = arith.addi %0, %arg1 : i32
    %c0_i32 = arith.constant 0 : i32
    %2 = arith.minsi %1, %c0_i32 : i32
    %c0_i32_0 = arith.constant 0 : i32
    %c0_i32_1 = arith.constant 0 : i32
    return %2, %c0_i32_0 : i32, i32
  }
  func.func @transform_1(%arg0: i32, %arg1: i32) -> (i32, i32) {
    %c1_i32 = arith.constant 1 : i32
    %0 = arith.muli %arg0, %c1_i32 : i32
    %1 = arith.addi %0, %arg1 : i32
    %c0_i32 = arith.constant 0 : i32
    %2 = arith.minsi %1, %c0_i32 : i32
    %c0_i32_0 = arith.constant 0 : i32
    %c0_i32_1 = arith.constant 0 : i32
    return %2, %c0_i32_0 : i32, i32
  }
  func.func @transform_2(%arg0: i32, %arg1: i32) -> (i32, i32, i32, i32) {
    %c0_i32 = arith.constant 0 : i32
    %c0_i32_0 = arith.constant 0 : i32
    %c0_i32_1 = arith.constant 0 : i32
    %c0_i32_2 = arith.constant 0 : i32
    return %arg0, %c0_i32, %c0_i32_0, %c0_i32_1 : i32, i32, i32, i32
  }
}

</mosaic_0001>

<llo_original>
// kernel: tpu_custom_call.1
$region0: #{tpu_custom_call.1}
  #allocation0 [shape = 'u32[]', space=smem, size = 0x4, offset = 0x4, fixed_abs, tag = 'smem constant byte address 0x4 - core index']
  #allocation1 [shape = 'u32[144,128]{1,0:T(1,128)}', space=vmem, size = 0x12000, scoped, tag = 'internal scratch']
  %s0 = inlined_call_operand.hbm [shape: f32[16,128], index: 0, kind: input, shape index: {}]
  %s1 = inlined_call_operand.hbm [shape: f32[16,128], index: 1, kind: input, shape index: {}]
  %s2 = inlined_call_operand.hbm [shape: f32[1,2,8,128], index: 2, kind: output, shape index: {}]
  %s3 = sld [smem:[#allocation0]]
  $region30: #{tpu_custom_call.1} parent=0
    _
  %s5 = ssub.s32 1, %s3
  %s6 = scalar_select 0, %s5, %s3
  $region1: #{tpu_custom_call.1} parent=0
    #allocation2 [shape = 'u8[8192]{0}', space=vmem, size = 0x2000, scoped, tag = 'input window, operand 0, single buffered']
    #allocation3 [shape = 's32[1]{0}', space=sflag, size = 0x4, scoped, tag = 'scoped memory for tpu_custom_call.1']
    #allocation4 [shape = 's32[1]{0}', space=sflag, size = 0x4, scoped, tag = 'scoped memory for tpu_custom_call.1']
    #allocation5 [shape = 'u8[8192]{0}', space=vmem, size = 0x2000, scoped, tag = 'input window, operand 1, single buffered']
    #allocation6 [shape = 's32[1]{0}', space=sflag, size = 0x4, scoped, tag = 'scoped memory for tpu_custom_call.1']
    #allocation7 [shape = 'u8[8192]{0}', space=vmem, size = 0x2000, scoped, tag = 'output window, operand 0, single buffered']
    %7 = vsyncpa [#allocation3], 0
    %8 = vsyncpa [#allocation6], 0
    %9 = vsyncpa [#allocation4], 0
    // Predicated region
    $region2: #{tpu_custom_call.1} parent=1 // pred_check
      _
    $region3: #{tpu_custom_call.1} parent=1 // pred_check_branch
      %11 = sbr.rel (0) target = $region5
    $region4: #{tpu_custom_call.1} parent=1 // pred_region
      %s12 = sadd.s32 0, 0
      %p13 = scmp.lt.s32.totalorder %s12, 0
      %s14 = scalar_select %p13, %s12, 0
      %s15 = smul.u32 2, %s14
      %s17 = ssub.s32 256, 256
      %18 = vsyncadd [#allocation3], %s17
      %s19 = smul.addr %s15, 128
      %s20 = scalar_lea.hbm %s0, %s19
      %s21 = sshll.u32 [#allocation2], 4
      %s22 = int_to_ptr.vmem [resolvable:$true] %s21
      %27 = dma.hbm_to_vmem [thread:$0]  %s20, 256, %s22, [#allocation3], 128, 128, 8
    $region5: #{tpu_custom_call.1} parent=1 // pred_fallthru
      _
    // Predicated region
    $region6: #{tpu_custom_call.1} parent=1 // pred_check
      _
    $region7: #{tpu_custom_call.1} parent=1 // pred_check_branch
      %29 = sbr.rel (0) target = $region9
    $region8: #{tpu_custom_call.1} parent=1 // pred_region
      %s30 = sadd.s32 0, 0
      %p31 = scmp.lt.s32.totalorder %s30, 0
      %s32 = scalar_select %p31, %s30, 0
      %s33 = smul.u32 2, %s32
      %s35 = ssub.s32 256, 256
      %36 = vsyncadd [#allocation6], %s35
      %s37 = smul.addr %s33, 128
      %s38 = scalar_lea.hbm %s1, %s37
      %s39 = sshll.u32 [#allocation5], 4
      %s40 = int_to_ptr.vmem [resolvable:$true] %s39
      %45 = dma.hbm_to_vmem [thread:$0]  %s38, 256, %s40, [#allocation6], 128, 128, 8
    $region9: #{tpu_custom_call.1} parent=1 // pred_fallthru
      _
    // Predicated region
    $region10: #{tpu_custom_call.1} parent=1 // pred_check
      _
    $region11: #{tpu_custom_call.1} parent=1 // pred_check_branch
      %47 = sbr.rel (0) target = $region13
    $region12: #{tpu_custom_call.1} parent=1 // pred_region
      %48 = dma.done [#allocation3], 256
    $region13: #{tpu_custom_call.1} parent=1 // pred_fallthru
      _
    // Predicated region
    $region14: #{tpu_custom_call.1} parent=1 // pred_check
      _
    $region15: #{tpu_custom_call.1} parent=1 // pred_check_branch
      %50 = sbr.rel (0) target = $region17
    $region16: #{tpu_custom_call.1} parent=1 // pred_region
      %51 = dma.done [#allocation6], 256
    $region17: #{tpu_custom_call.1} parent=1 // pred_fallthru
      _
    %s52 = sadd.s32 0, 0
    %p53 = scmp.lt.s32.totalorder %s52, 0
    %s54 = scalar_select %p53, %s52, 0
    %s55 = smul.u32 2, %s54
    %s56 = sadd.s32 0, 0
    %p57 = scmp.lt.s32.totalorder %s56, 0
    %s58 = scalar_select %p57, %s56, 0
    %s59 = smul.u32 2, %s58
    %p60 = scmp.eq.s32.totalorder 0, 0
    // Predicated region
    $region18: #{tpu_custom_call.1} parent=1 // pred_check
      %p61 = pneg %p60
    $region19: #{tpu_custom_call.1} parent=1 // pred_check_branch
      %63 = sbr.rel (%p61) target = $region21
    $region20: #{tpu_custom_call.1} parent=1 // pred_region
      %64 = vst [vmem:[#allocation7] sm:$0xff] 0.0
      %65 = vst [vmem:[#allocation7 + $0x8] sm:$0xff] 0.0
    $region21: #{tpu_custom_call.1} parent=1 // pred_fallthru
      _
    %v66 = vld [vmem:[#allocation2] sm:$0xff]
    %v67 = vld [vmem:[#allocation2 + $0x8] sm:$0xff]
    %v68 = vld [vmem:[#allocation5] sm:$0xff]
    %v69 = vld [vmem:[#allocation5 + $0x8] sm:$0xff]
    %v70 = vmul.f32 %v66, %v68
    %v71 = vmul.f32 %v67, %v69
    %v72 = vadd.f32 %v70, %v71
    %v73 = vadd.f32 %v66, %v68
    %v74 = vadd.f32 %v67, %v69
    %v75 = vadd.f32 %v73, %v74
    %v76 = vadd.f32 %v72, 0.0
    %v77 = vadd.f32 %v75, 0.0
    %v78 = vld [vmem:[#allocation7] sm:$0xff]
    %v79 = vadd.f32 %v78, %v76
    %80 = vst [vmem:[#allocation7] sm:$0xff] %v79
    %s81 = scalar_lea.vmem [#allocation7], 8
    %v82 = vld [vmem:[%s81] sm:$0xff]
    %v83 = vadd.f32 %v82, %v77
    %84 = vst [vmem:[%s81] sm:$0xff] %v83
    // Predicated region
    $region22: #{tpu_custom_call.1} parent=1 // pred_check
      _
    $region23: #{tpu_custom_call.1} parent=1 // pred_check_branch
      %86 = sbr.rel (0) target = $region25
    $region24: #{tpu_custom_call.1} parent=1 // pred_region
      %s88 = ssub.s32 256, 256
      %89 = vsyncadd [#allocation4], %s88
      %s90 = sshll.u32 [#allocation7], 4
      %s91 = int_to_ptr.vmem [resolvable:$true] %s90
      %96 = dma.vmem_to_hbm [thread:$0]  %s91, 256, %s2, [#allocation4], 128, 128, 8
    $region25: #{tpu_custom_call.1} parent=1 // pred_fallthru
      _
    // Predicated region
    $region26: #{tpu_custom_call.1} parent=1 // pred_check
      _
    $region27: #{tpu_custom_call.1} parent=1 // pred_check_branch
      %98 = sbr.rel (0) target = $region29
    $region28: #{tpu_custom_call.1} parent=1 // pred_region
      %99 = dma.done [#allocation4], 256
    $region29: #{tpu_custom_call.1} parent=1 // pred_fallthru
      _
    %100 = vsyncpa [#allocation3], 1
    %101 = vsyncpa [#allocation6], 1
    %102 = vsyncpa [#allocation4], 1

</llo_original>
